<compile_context>
chip_gen: v5e
topology: v5e:2x2
jax: 0.10.0
libtpu: 0.0.40
codegen_flags: <defaults>
</compile_context>

<pallas_src>
import jax
import jax.numpy as jnp
from jax import lax
from jax.experimental import pallas as pl
from jax.experimental.pallas import tpu as pltpu

# ---------------- configuration ----------------
B = 2
CIN = 4
H = W = 16
OUT = 4                      # out_channels
RADIX = 2
CARD = 1                     # cardinality. rSoftmax pairing below assumes CARD == 1.
REDUCTION = 4
RC = OUT * RADIX             # conv output channels (8)
INTER = max(CIN * RADIX // REDUCTION, 32)   # 32
KS = 3
PAD = 1
CONV_GROUPS = CARD * RADIX   # 2
IN_PG = CIN // CONV_GROUPS   # input channels per conv group  (2)
OUT_PG = RC // CONV_GROUPS   # output channels per conv group (4)
HW = H * W                   # 256
PATCH_PG = IN_PG * KS * KS   # 18 patch rows per conv group
EPS = 1e-5


# ---------------- Pallas kernel ----------------
def splat_kernel(p_ref, wc_ref, sh0_ref, wfc1_ref, sh1_ref, wfc2_ref, bfc2_ref,
                 out_ref):
    # p_ref   : (1, CONV_GROUPS, PATCH_PG, HW)  im2col patches for this batch elem
    # wc_ref  : (CONV_GROUPS, OUT_PG, PATCH_PG) conv weights (BN0 scale folded in)
    # sh0_ref : (CONV_GROUPS, OUT_PG, 1)        folded conv bias + BN0 shift
    # wfc1_ref: (OUT, INTER)                    fc1 weight^T (BN1 scale folded in)
    # sh1_ref : (1, INTER)                      folded fc1 bias + BN1 shift
    # wfc2_ref: (RADIX, OUT, INTER)             fc2 weight split by radix
    # bfc2_ref: (RADIX, OUT, 1)                 fc2 bias split by radix
    # out_ref : (1, OUT, HW)

    # grouped 3x3 conv as two per-group MXU matmuls, N = HW = 256 (lane-dense),
    # followed by folded bias/BN0 shift + ReLU.  y0/y1 are the two radix splits.
    y0 = jnp.dot(wc_ref[0], p_ref[0, 0], preferred_element_type=jnp.float32)
    y1 = jnp.dot(wc_ref[1], p_ref[0, 1], preferred_element_type=jnp.float32)
    y0 = jnp.maximum(y0 + sh0_ref[0], 0.0)                        # (OUT, HW)
    y1 = jnp.maximum(y1 + sh0_ref[1], 0.0)                        # (OUT, HW)

    # radix sum + global average pool (lane reduce over HW)
    gap = jnp.mean(y0 + y1, axis=1, keepdims=True)                # (OUT, 1)

    # fc1 + BN1 + ReLU on the VPU: broadcast-mul then sublane reduce.
    g1 = jnp.sum(wfc1_ref[...] * gap, axis=0, keepdims=True) + sh1_ref[...]
    g1 = jnp.maximum(g1, 0.0)                                     # (1, INTER)

    # fc2 -> attention logits for each radix branch (lane reduce over INTER).
    l0 = jnp.sum(wfc2_ref[0] * g1, axis=1, keepdims=True) + bfc2_ref[0]   # (OUT, 1)
    l1 = jnp.sum(wfc2_ref[1] * g1, axis=1, keepdims=True) + bfc2_ref[1]   # (OUT, 1)

    # rSoftmax across the radix axis (cardinality == 1).
    # Exact divide on a (OUT,1) tensor — negligible cost, keeps 1e-4 tolerance.
    m = jnp.maximum(l0, l1)
    e0 = jnp.exp(l0 - m)
    e1 = jnp.exp(l1 - m)
    inv = 1.0 / (e0 + e1)
    a0 = e0 * inv
    a1 = e1 * inv

    # attention-weighted radix recombination; lane-dense (OUT, 256) store.
    out_ref[0] = y0 * a0 + y1 * a1


# ---------------- wrapper ----------------
def im2col_t(x):
    """x: (B, CIN, H, W) -> patches (B, CONV_GROUPS, IN_PG*KS*KS, H*W).

    Taps are stacked directly after the channel axis so the target layout is
    reached with a single reshape (no transpose). Row order within a group is
    (cin_in_group, kh, kw), matching the flattened conv weight."""
    xp = jnp.pad(x, ((0, 0), (0, 0), (PAD, PAD), (PAD, PAD)))
    taps = [xp[:, :, kh:kh + H, kw:kw + W] for kh in range(KS) for kw in range(KS)]
    pat = jnp.stack(taps, axis=2)                                 # (B, CIN, K*K, H, W)
    return pat.reshape(B, CONV_GROUPS, PATCH_PG, HW)


def prepare_params(w_conv, b_conv, gamma0, beta0, mean0, var0,
                   w_fc1, b_fc1, gamma1, beta1, mean1, var1, w_fc2, b_fc2):
    """Fold eval-mode BatchNorms and biases into matmul weights/shifts (host-side)."""
    # BN0 + conv bias folded into conv weight / per-channel shift.
    s0 = gamma0 / jnp.sqrt(var0 + EPS)                            # (RC,)
    shift0 = s0 * b_conv + beta0 - mean0 * s0                     # (RC,)
    w_flat = w_conv.reshape(RC, PATCH_PG) * s0[:, None]           # (RC, 18)
    wc = w_flat.reshape(CONV_GROUPS, OUT_PG, PATCH_PG)            # (2, 4, 18)
    sh0 = shift0.reshape(CONV_GROUPS, OUT_PG, 1)                  # (2, 4, 1)

    # BN1 folded into fc1.
    s1 = gamma1 / jnp.sqrt(var1 + EPS)                            # (INTER,)
    wfc1_k = (w_fc1 * s1[:, None]).T                              # (OUT, INTER)
    sh1 = (s1 * b_fc1 + beta1 - mean1 * s1).reshape(1, INTER)     # (1, INTER)

    # fc2 split by radix branch (cardinality == 1 layout).
    wfc2_k = w_fc2.reshape(RADIX, OUT, INTER)                     # (2, 4, 32)
    bfc2_k = b_fc2.reshape(RADIX, OUT, 1)                         # (2, 4, 1)
    return wc, sh0, wfc1_k, sh1, wfc2_k, bfc2_k


@jax.jit
def splat_conv2d(x, wc, sh0, wfc1, sh1, wfc2, bfc2):
    patches = im2col_t(x)                                         # (B, 2, 18, HW)

    full2 = lambda b: (0, 0)
    full3 = lambda b: (0, 0, 0)

    out = pl.pallas_call(
        splat_kernel,
        out_shape=jax.ShapeDtypeStruct((B, OUT, HW), jnp.float32),
        grid=(B,),
        in_specs=[
            pl.BlockSpec((1, CONV_GROUPS, PATCH_PG, HW), lambda b: (b, 0, 0, 0)),
            pl.BlockSpec((CONV_GROUPS, OUT_PG, PATCH_PG), full3),
            pl.BlockSpec((CONV_GROUPS, OUT_PG, 1), full3),
            pl.BlockSpec((OUT, INTER), full2),
            pl.BlockSpec((1, INTER), full2),
            pl.BlockSpec((RADIX, OUT, INTER), full3),
            pl.BlockSpec((RADIX, OUT, 1), full3),
        ],
        out_specs=pl.BlockSpec((1, OUT, HW), lambda b: (b, 0, 0)),
        # Keep the 2-way batch axis "parallel" so v7x's two TensorCores are both
        # fed; on single-TC v5e/v6e this is just a 2-iteration loop (~0.35 us
        # extra fixed overhead at this problem size).
        compiler_params=pltpu.CompilerParams(dimension_semantics=("parallel",)),
    )(patches, wc, sh0, wfc1, sh1, wfc2, bfc2)

    # (B, OUT, HW) is already channel-major: NCHW via pure reshape, no transpose.
    return out.reshape(B, OUT, H, W)


# ---------------- pure-JAX reference (correctness check) ----------------
def reference(x, w_conv, b_conv, gamma0, beta0, mean0, var0,
              w_fc1, b_fc1, gamma1, beta1, mean1, var1, w_fc2, b_fc2):
    y = lax.conv_general_dilated(
        x, w_conv, window_strides=(1, 1), padding=((PAD, PAD), (PAD, PAD)),
        feature_group_count=CONV_GROUPS,
        dimension_numbers=("NCHW", "OIHW", "NCHW"))
    y = y + b_conv[None, :, None, None]
    s0 = gamma0 / jnp.sqrt(var0 + EPS)
    t0 = beta0 - mean0 * s0
    y = y * s0[None, :, None, None] + t0[None, :, None, None]
    y = jnp.maximum(y, 0.0)
    gap = jnp.mean(y[:, :OUT] + y[:, OUT:], axis=(2, 3))          # (B, OUT)
    g1 = gap @ w_fc1.T + b_fc1                                    # (B, INTER)
    s1 = gamma1 / jnp.sqrt(var1 + EPS)
    t1 = beta1 - mean1 * s1
    g1 = jnp.maximum(g1 * s1 + t1, 0.0)
    logits = g1 @ w_fc2.T + b_fc2                                 # (B, RC)
    l0, l1 = logits[:, :OUT], logits[:, OUT:]
    m = jnp.maximum(l0, l1)
    e0, e1 = jnp.exp(l0 - m), jnp.exp(l1 - m)
    a0 = e0 / (e0 + e1)
    a1 = e1 / (e0 + e1)
    return y[:, :OUT] * a0[:, :, None, None] + y[:, OUT:] * a1[:, :, None, None]


# ---------------- main ----------------
if __name__ == "__main__":
    key = jax.random.PRNGKey(0)
    ks = jax.random.split(key, 16)

    # deterministic parameter init (torch-shape conventions)
    w_conv = jax.random.normal(ks[0], (RC, IN_PG, KS, KS), jnp.float32) * 0.1
    b_conv = jax.random.normal(ks[1], (RC,), jnp.float32) * 0.1
    gamma0 = 1.0 + 0.1 * jax.random.normal(ks[2], (RC,), jnp.float32)
    beta0 = 0.1 * jax.random.normal(ks[3], (RC,), jnp.float32)
    mean0 = 0.05 * jax.random.normal(ks[4], (RC,), jnp.float32)
    var0 = 1.0 + 0.1 * jnp.abs(jax.random.normal(ks[5], (RC,), jnp.float32))
    w_fc1 = jax.random.normal(ks[6], (INTER, OUT), jnp.float32) * 0.1   # torch 1x1 conv (inter, out)
    b_fc1 = jax.random.normal(ks[7], (INTER,), jnp.float32) * 0.1
    gamma1 = 1.0 + 0.1 * jax.random.normal(ks[8], (INTER,), jnp.float32)
    beta1 = 0.1 * jax.random.normal(ks[9], (INTER,), jnp.float32)
    mean1 = 0.05 * jax.random.normal(ks[10], (INTER,), jnp.float32)
    var1 = 1.0 + 0.1 * jnp.abs(jax.random.normal(ks[11], (INTER,), jnp.float32))
    w_fc2 = jax.random.normal(ks[12], (RC, INTER), jnp.float32) * 0.1   # torch 1x1 conv (rc, inter)
    b_fc2 = jax.random.normal(ks[13], (RC,), jnp.float32) * 0.1

    # input (NCHW, as in the PyTorch module)
    x = jax.random.normal(ks[14], (B, CIN, H, W), jnp.float32)

    params = prepare_params(w_conv, b_conv, gamma0, beta0, mean0, var0,
                            w_fc1, b_fc1, gamma1, beta1, mean1, var1,
                            w_fc2, b_fc2)

    out = splat_conv2d(x, *params)
    out = jax.block_until_ready(out)

    ref = reference(x, w_conv, b_conv, gamma0, beta0, mean0, var0,
                    w_fc1, b_fc1, gamma1, beta1, mean1, var1, w_fc2, b_fc2)
    assert out.shape == (B, OUT, H, W)
    assert jnp.allclose(out, ref, rtol=1e-4, atol=1e-4), \
        float(jnp.max(jnp.abs(out - ref)))

    # TODO(synk): rSoftmax pairing / conv-group == radix-split identification
    # assumes cardinality == 1 (module default used here); cardinality > 1
    # needs the (card, radix) interleave permutation of the fc2 logits.
    # TODO(synk): radix == 1 path of the module uses sigmoid gating; only the
    # radix == 2 softmax path is implemented.
    print("KERNEL_OK")
</pallas_src>

<mosaic_0001>
module attributes {stable_mosaic.version = 11 : i64} {
  func.func @splat_kernel(%arg0: i32, %arg1: memref<1x2x18x256xf32, #tpu.memory_space<vmem>>, %arg2: memref<2x4x18xf32, #tpu.memory_space<vmem>>, %arg3: memref<2x4x1xf32, #tpu.memory_space<vmem>>, %arg4: memref<4x32xf32, #tpu.memory_space<vmem>>, %arg5: memref<1x32xf32, #tpu.memory_space<vmem>>, %arg6: memref<2x4x32xf32, #tpu.memory_space<vmem>>, %arg7: memref<2x4x1xf32, #tpu.memory_space<vmem>>, %arg8: memref<1x4x256xf32, #tpu.memory_space<vmem>>) attributes {dimension_semantics = [#tpu.dimension_semantics<parallel>], iteration_bounds = array<i64: 2>, scalar_prefetch = 0 : i64, scratch_operands = 0 : i64, tpu.core_type = #tpu.core_type<tc>, window_params = [{transform_indices = @transform_0, window_bounds = array<i64: 1, 2, 18, 256>}, {pipeline_mode = #tpu.pipeline_mode<synchronous>, transform_indices = @transform_1, window_bounds = array<i64: 2, 4, 18>}, {pipeline_mode = #tpu.pipeline_mode<synchronous>, transform_indices = @transform_2, window_bounds = array<i64: 2, 4, 1>}, {pipeline_mode = #tpu.pipeline_mode<synchronous>, transform_indices = @transform_3, window_bounds = array<i64: 4, 32>}, {pipeline_mode = #tpu.pipeline_mode<synchronous>, transform_indices = @transform_4, window_bounds = array<i64: 1, 32>}, {pipeline_mode = #tpu.pipeline_mode<synchronous>, transform_indices = @transform_5, window_bounds = array<i64: 2, 4, 32>}, {pipeline_mode = #tpu.pipeline_mode<synchronous>, transform_indices = @transform_6, window_bounds = array<i64: 2, 4, 1>}, {transform_indices = @transform_7, window_bounds = array<i64: 1, 4, 256>}]} {
    %c0 = arith.constant 0 : index
    %c0_0 = arith.constant 0 : index
    %c0_1 = arith.constant 0 : index
    %0 = vector.load %arg2[%c0, %c0_0, %c0_1] : memref<2x4x18xf32, #tpu.memory_space<vmem>>, vector<1x4x18xf32>
    %1 = vector.shape_cast %0 : vector<1x4x18xf32> to vector<4x18xf32>
    %c0_2 = arith.constant 0 : index
    %c0_3 = arith.constant 0 : index
    %c0_4 = arith.constant 0 : index
    %c0_5 = arith.constant 0 : index
    %2 = vector.load %arg1[%c0_2, %c0_3, %c0_4, %c0_5] : memref<1x2x18x256xf32, #tpu.memory_space<vmem>>, vector<1x1x18x256xf32>
    %3 = vector.shape_cast %2 : vector<1x1x18x256xf32> to vector<18x256xf32>
    %cst = arith.constant dense<0.000000e+00> : vector<4x256xf32>
    %4 = tpu.matmul %1, %3, %cst {dimension_numbers = #tpu.dot_dimension_numbers<[1], [0], [0], [1], [0, 0, 1, 1], [], []>} : vector<4x18xf32>, vector<18x256xf32>, vector<4x256xf32> -> vector<4x256xf32>
    %c1 = arith.constant 1 : index
    %c0_6 = arith.constant 0 : index
    %c0_7 = arith.constant 0 : index
    %5 = vector.load %arg2[%c1, %c0_6, %c0_7] : memref<2x4x18xf32, #tpu.memory_space<vmem>>, vector<1x4x18xf32>
    %6 = vector.shape_cast %5 : vector<1x4x18xf32> to vector<4x18xf32>
    %c0_8 = arith.constant 0 : index
    %c1_9 = arith.constant 1 : index
    %c0_10 = arith.constant 0 : index
    %c0_11 = arith.constant 0 : index
    %7 = vector.load %arg1[%c0_8, %c1_9, %c0_10, %c0_11] : memref<1x2x18x256xf32, #tpu.memory_space<vmem>>, vector<1x1x18x256xf32>
    %8 = vector.shape_cast %7 : vector<1x1x18x256xf32> to vector<18x256xf32>
    %cst_12 = arith.constant dense<0.000000e+00> : vector<4x256xf32>
    %9 = tpu.matmul %6, %8, %cst_12 {dimension_numbers = #tpu.dot_dimension_numbers<[1], [0], [0], [1], [0, 0, 1, 1], [], []>} : vector<4x18xf32>, vector<18x256xf32>, vector<4x256xf32> -> vector<4x256xf32>
    %c0_13 = arith.constant 0 : index
    %c0_14 = arith.constant 0 : index
    %c0_15 = arith.constant 0 : index
    %10 = vector.load %arg3[%c0_13, %c0_14, %c0_15] : memref<2x4x1xf32, #tpu.memory_space<vmem>>, vector<1x4x1xf32>
    %11 = vector.shape_cast %10 : vector<1x4x1xf32> to vector<4x1xf32>
    %12 = vector.broadcast %11 : vector<4x1xf32> to vector<4x256xf32>
    %13 = arith.addf %4, %12 : vector<4x256xf32>
    %cst_16 = arith.constant 0.000000e+00 : f32
    %14 = vector.broadcast %cst_16 : f32 to vector<4x256xf32>
    %15 = arith.maximumf %13, %14 : vector<4x256xf32>
    %c1_17 = arith.constant 1 : index
    %c0_18 = arith.constant 0 : index
    %c0_19 = arith.constant 0 : index
    %16 = vector.load %arg3[%c1_17, %c0_18, %c0_19] : memref<2x4x1xf32, #tpu.memory_space<vmem>>, vector<1x4x1xf32>
    %17 = vector.shape_cast %16 : vector<1x4x1xf32> to vector<4x1xf32>
    %18 = vector.broadcast %17 : vector<4x1xf32> to vector<4x256xf32>
    %19 = arith.addf %9, %18 : vector<4x256xf32>
    %cst_20 = arith.constant 0.000000e+00 : f32
    %20 = vector.broadcast %cst_20 : f32 to vector<4x256xf32>
    %21 = arith.maximumf %19, %20 : vector<4x256xf32>
    %22 = arith.addf %15, %21 : vector<4x256xf32>
    %cst_21 = arith.constant dense<0.000000e+00> : vector<4xf32>
    %23 = vector.multi_reduction <add>, %22, %cst_21 [1] : vector<4x256xf32> to vector<4xf32>
    %24 = vector.shape_cast %23 : vector<4xf32> to vector<4x1xf32>
    %cst_22 = arith.constant 2.560000e+02 : f32
    %25 = vector.broadcast %cst_22 : f32 to vector<4x1xf32>
    %26 = arith.divf %24, %25 : vector<4x1xf32>
    %c0_23 = arith.constant 0 : index
    %c0_24 = arith.constant 0 : index
    %27 = vector.load %arg4[%c0_23, %c0_24] : memref<4x32xf32, #tpu.memory_space<vmem>>, vector<4x32xf32>
    %28 = vector.broadcast %26 : vector<4x1xf32> to vector<4x32xf32>
    %29 = arith.mulf %27, %28 : vector<4x32xf32>
    %cst_25 = arith.constant dense<0.000000e+00> : vector<32xf32>
    %30 = vector.multi_reduction <add>, %29, %cst_25 [0] : vector<4x32xf32> to vector<32xf32>
    %31 = vector.shape_cast %30 : vector<32xf32> to vector<1x32xf32>
    %c0_26 = arith.constant 0 : index
    %c0_27 = arith.constant 0 : index
    %32 = vector.load %arg5[%c0_26, %c0_27] : memref<1x32xf32, #tpu.memory_space<vmem>>, vector<1x32xf32>
    %33 = arith.addf %31, %32 : vector<1x32xf32>
    %cst_28 = arith.constant 0.000000e+00 : f32
    %34 = vector.broadcast %cst_28 : f32 to vector<1x32xf32>
    %35 = arith.maximumf %33, %34 : vector<1x32xf32>
    %c0_29 = arith.constant 0 : index
    %c0_30 = arith.constant 0 : index
    %c0_31 = arith.constant 0 : index
    %36 = vector.load %arg6[%c0_29, %c0_30, %c0_31] : memref<2x4x32xf32, #tpu.memory_space<vmem>>, vector<1x4x32xf32>
    %37 = vector.shape_cast %36 : vector<1x4x32xf32> to vector<4x32xf32>
    %38 = vector.broadcast %35 : vector<1x32xf32> to vector<4x32xf32>
    %39 = arith.mulf %37, %38 : vector<4x32xf32>
    %cst_32 = arith.constant dense<0.000000e+00> : vector<4xf32>
    %40 = vector.multi_reduction <add>, %39, %cst_32 [1] : vector<4x32xf32> to vector<4xf32>
    %41 = vector.shape_cast %40 : vector<4xf32> to vector<4x1xf32>
    %c0_33 = arith.constant 0 : index
    %c0_34 = arith.constant 0 : index
    %c0_35 = arith.constant 0 : index
    %42 = vector.load %arg7[%c0_33, %c0_34, %c0_35] : memref<2x4x1xf32, #tpu.memory_space<vmem>>, vector<1x4x1xf32>
    %43 = vector.shape_cast %42 : vector<1x4x1xf32> to vector<4x1xf32>
    %44 = arith.addf %41, %43 : vector<4x1xf32>
    %c1_36 = arith.constant 1 : index
    %c0_37 = arith.constant 0 : index
    %c0_38 = arith.constant 0 : index
    %45 = vector.load %arg6[%c1_36, %c0_37, %c0_38] : memref<2x4x32xf32, #tpu.memory_space<vmem>>, vector<1x4x32xf32>
    %46 = vector.shape_cast %45 : vector<1x4x32xf32> to vector<4x32xf32>
    %47 = vector.broadcast %35 : vector<1x32xf32> to vector<4x32xf32>
    %48 = arith.mulf %46, %47 : vector<4x32xf32>
    %cst_39 = arith.constant dense<0.000000e+00> : vector<4xf32>
    %49 = vector.multi_reduction <add>, %48, %cst_39 [1] : vector<4x32xf32> to vector<4xf32>
    %50 = vector.shape_cast %49 : vector<4xf32> to vector<4x1xf32>
    %c1_40 = arith.constant 1 : index
    %c0_41 = arith.constant 0 : index
    %c0_42 = arith.constant 0 : index
    %51 = vector.load %arg7[%c1_40, %c0_41, %c0_42] : memref<2x4x1xf32, #tpu.memory_space<vmem>>, vector<1x4x1xf32>
    %52 = vector.shape_cast %51 : vector<1x4x1xf32> to vector<4x1xf32>
    %53 = arith.addf %50, %52 : vector<4x1xf32>
    %54 = arith.maximumf %44, %53 : vector<4x1xf32>
    %55 = arith.subf %44, %54 : vector<4x1xf32>
    %56 = math.exp %55 : vector<4x1xf32>
    %57 = arith.subf %53, %54 : vector<4x1xf32>
    %58 = math.exp %57 : vector<4x1xf32>
    %59 = arith.addf %56, %58 : vector<4x1xf32>
    %cst_43 = arith.constant 1.000000e+00 : f32
    %60 = vector.broadcast %cst_43 : f32 to vector<4x1xf32>
    %61 = arith.divf %60, %59 : vector<4x1xf32>
    %62 = arith.mulf %56, %61 : vector<4x1xf32>
    %63 = arith.mulf %58, %61 : vector<4x1xf32>
    %64 = vector.broadcast %62 : vector<4x1xf32> to vector<4x256xf32>
    %65 = arith.mulf %15, %64 : vector<4x256xf32>
    %66 = vector.broadcast %63 : vector<4x1xf32> to vector<4x256xf32>
    %67 = arith.mulf %21, %66 : vector<4x256xf32>
    %68 = arith.addf %65, %67 : vector<4x256xf32>
    %c0_44 = arith.constant 0 : index
    %c0_45 = arith.constant 0 : index
    %c0_46 = arith.constant 0 : index
    %69 = vector.load %arg8[%c0_44, %c0_45, %c0_46] : memref<1x4x256xf32, #tpu.memory_space<vmem>>, vector<1x4x256xf32>
    %70 = vector.shape_cast %69 : vector<1x4x256xf32> to vector<4x256xf32>
    %71 = vector.shape_cast %68 : vector<4x256xf32> to vector<1x4x256xf32>
    tpu.vector_store %arg8[%c0_44, %c0_45, %c0_46], %71 {strides = array<i32>} : memref<1x4x256xf32, #tpu.memory_space<vmem>>, vector<1x4x256xf32>,
    return
  }
  func.func @transform_0(%arg0: i32) -> (i32, i32, i32, i32) {
    %c0_i32 = arith.constant 0 : i32
    %c0_i32_0 = arith.constant 0 : i32
    %c0_i32_1 = arith.constant 0 : i32
    %c0_i32_2 = arith.constant 0 : i32
    return %arg0, %c0_i32, %c0_i32_0, %c0_i32_1 : i32, i32, i32, i32
  }
  func.func @transform_1(%arg0: i32) -> (i32, i32, i32) {
    %c0_i32 = arith.constant 0 : i32
    %c0_i32_0 = arith.constant 0 : i32
    %c0_i32_1 = arith.constant 0 : i32
    %c0_i32_2 = arith.constant 0 : i32
    return %c0_i32, %c0_i32_0, %c0_i32_1 : i32, i32, i32
  }
  func.func @transform_2(%arg0: i32) -> (i32, i32, i32) {
    %c0_i32 = arith.constant 0 : i32
    %c0_i32_0 = arith.constant 0 : i32
    %c0_i32_1 = arith.constant 0 : i32
    %c0_i32_2 = arith.constant 0 : i32
    return %c0_i32, %c0_i32_0, %c0_i32_1 : i32, i32, i32
  }
  func.func @transform_3(%arg0: i32) -> (i32, i32) {
    %c0_i32 = arith.constant 0 : i32
    %c0_i32_0 = arith.constant 0 : i32
    %c0_i32_1 = arith.constant 0 : i32
    return %c0_i32, %c0_i32_0 : i32, i32
  }
  func.func @transform_4(%arg0: i32) -> (i32, i32) {
    %c0_i32 = arith.constant 0 : i32
    %c0_i32_0 = arith.constant 0 : i32
    %c0_i32_1 = arith.constant 0 : i32
    return %c0_i32, %c0_i32_0 : i32, i32
  }
  func.func @transform_5(%arg0: i32) -> (i32, i32, i32) {
    %c0_i32 = arith.constant 0 : i32
    %c0_i32_0 = arith.constant 0 : i32
    %c0_i32_1 = arith.constant 0 : i32
    %c0_i32_2 = arith.constant 0 : i32
    return %c0_i32, %c0_i32_0, %c0_i32_1 : i32, i32, i32
  }
  func.func @transform_6(%arg0: i32) -> (i32, i32, i32) {
    %c0_i32 = arith.constant 0 : i32
    %c0_i32_0 = arith.constant 0 : i32
    %c0_i32_1 = arith.constant 0 : i32
    %c0_i32_2 = arith.constant 0 : i32
    return %c0_i32, %c0_i32_0, %c0_i32_1 : i32, i32, i32
  }
  func.func @transform_7(%arg0: i32) -> (i32, i32, i32) {
    %c0_i32 = arith.constant 0 : i32
    %c0_i32_0 = arith.constant 0 : i32
    %c0_i32_1 = arith.constant 0 : i32
    return %arg0, %c0_i32, %c0_i32_0 : i32, i32, i32
  }
}

</mosaic_0001>

<llo_original>
// kernel: splat_conv2d.1
$region0: #{splat_conv2d.1}
  #allocation0 [shape = 'u32[]', space=smem, size = 0x4, offset = 0x4, fixed_abs, tag = 'smem constant byte address 0x4 - core index']
  #allocation1 [shape = 'u32[72,128]{1,0:T(1,128)}', space=vmem, size = 0x9000, scoped, tag = 'internal scratch']
  %s0 = inlined_call_operand.vmem [shape: f32[2,2,18,256], index: 0, kind: input, shape index: {}]
  %s1 = inlined_call_operand.vmem [shape: f32[2,4,18], index: 1, kind: input, shape index: {}]
  %s2 = inlined_call_operand.vmem [shape: f32[2,4,1], index: 2, kind: input, shape index: {}]
  %s3 = inlined_call_operand.vmem [shape: f32[4,32], index: 3, kind: input, shape index: {}]
  %s4 = inlined_call_operand.vmem [shape: f32[1,32], index: 4, kind: input, shape index: {}]
  %s5 = inlined_call_operand.vmem [shape: f32[2,4,32], index: 5, kind: input, shape index: {}]
  %s6 = inlined_call_operand.vmem [shape: f32[2,4,1], index: 6, kind: input, shape index: {}]
  %s7 = inlined_call_operand.vmem [shape: f32[2,4,256], index: 7, kind: output, shape index: {}]
  %s8 = sld [smem:[#allocation0]]
  $region61: #{splat_conv2d.1} parent=0
    _
  %s10 = ssub.s32 1, %s8
  %s11 = scalar_select 0, %s10, %s8
  loop: start=0, step=1, limit=4
  $region2: #{splat_conv2d.1} parent=0 // loop_pre_header
    _
  $region3: #{splat_conv2d.1} parent=0 // loop_header
    %s13 = sphi 0, %s17
    %p14 = scmp.ge.s32.totalorder %s13, 4
    %s23 = sphi 0, %s25
    %s26 = sphi 0, %s23
    %s27 = sphi 0, %s26
    %s43 = sphi 0, %s27
    %s47 = sphi 0, %s47
    %s49 = sphi 0, %s47
    %s50 = sphi 0, %s49
    %s64 = sphi 0, %s50
    %s68 = sphi 0, %s68
    %s70 = sphi 0, %s68
    %s71 = sphi 0, %s70
    %s85 = sphi 0, %s71
    %s89 = sphi 0, %s89
    %s91 = sphi 0, %s89
    %s92 = sphi 0, %s91
    %s106 = sphi 0, %s92
    %s110 = sphi 0, %s110
    %s112 = sphi 0, %s110
    %s113 = sphi 0, %s112
    %s127 = sphi 0, %s113
    %s131 = sphi 0, %s131
    %s133 = sphi 0, %s131
    %s134 = sphi 0, %s133
    %s148 = sphi 0, %s134
    %s152 = sphi 0, %s152
    %s154 = sphi 0, %s152
    %s155 = sphi 0, %s154
    %s169 = sphi 0, %s155
    %s175 = sphi 0, %s177
    %s178 = sphi 0, %s175
    %s179 = sphi 0, %s178
    %s195 = sphi 0, %s179
  $region4: #{splat_conv2d.1} parent=0 // loop_header_branch
    %16 = sbr.rel (%p14) target = $region8
  $region5: #{splat_conv2d.1} parent=0 // loop_body
    %s18 = ssub.s32 %s13, 1
    %s19 = ssub.s32 %s13, 2
    %s20 = sadd.s32 %s13, 1
    %s21 = ssub.s32 %s13, %s20
    %p22 = scmp.eq.s32.totalorder %s21, 0
    %s24 = sadd.s32 %s23, 1
    %s25 = scalar_select %p22, %s23, %s24
    %p28 = pneg %p22
    %p29 = scmp.eq.s32.totalorder %s13, 1
    %p30 = por %p28, %p29
    %p31 = scmp.ne.s32.totalorder %s23, %s26
    %p32 = scmp.eq.s32.totalorder %s13, 0
    %p33 = por %p31, %p32
    %p34 = scmp.ne.s32.totalorder %s23, %s26
    %p35 = scmp.eq.s32.totalorder %s18, 1
    %p36 = por %p34, %p35
    %p37 = scmp.ne.s32.totalorder %s26, %s27
    %p38 = scmp.eq.s32.totalorder %s18, 0
    %p39 = por %p37, %p38
    %p40 = scmp.ne.s32.totalorder %s26, %s27
    %p41 = scmp.eq.s32.totalorder %s19, 1
    %p42 = por %p40, %p41
    %p44 = scmp.ne.s32.totalorder %s27, %s43
    %p45 = scmp.eq.s32.totalorder %s19, 0
    %p46 = por %p44, %p45
    %s48 = sadd.s32 %s47, 1
    %p51 = scmp.eq.s32.totalorder %s13, 1
    %p52 = scmp.ne.s32.totalorder %s47, %s49
    %p53 = scmp.eq.s32.totalorder %s13, 0
    %p54 = por %p52, %p53
    %p55 = scmp.ne.s32.totalorder %s47, %s49
    %p56 = scmp.eq.s32.totalorder %s18, 1
    %p57 = por %p55, %p56
    %p58 = scmp.ne.s32.totalorder %s49, %s50
    %p59 = scmp.eq.s32.totalorder %s18, 0
    %p60 = por %p58, %p59
    %p61 = scmp.ne.s32.totalorder %s49, %s50
    %p62 = scmp.eq.s32.totalorder %s19, 1
    %p63 = por %p61, %p62
    %p65 = scmp.ne.s32.totalorder %s50, %s64
    %p66 = scmp.eq.s32.totalorder %s19, 0
    %p67 = por %p65, %p66
    %s69 = sadd.s32 %s68, 1
    %p72 = scmp.eq.s32.totalorder %s13, 1
    %p73 = scmp.ne.s32.totalorder %s68, %s70
    %p74 = scmp.eq.s32.totalorder %s13, 0
    %p75 = por %p73, %p74
    %p76 = scmp.ne.s32.totalorder %s68, %s70
    %p77 = scmp.eq.s32.totalorder %s18, 1
    %p78 = por %p76, %p77
    %p79 = scmp.ne.s32.totalorder %s70, %s71
    %p80 = scmp.eq.s32.totalorder %s18, 0
    %p81 = por %p79, %p80
    %p82 = scmp.ne.s32.totalorder %s70, %s71
    %p83 = scmp.eq.s32.totalorder %s19, 1
    %p84 = por %p82, %p83
    %p86 = scmp.ne.s32.totalorder %s71, %s85
    %p87 = scmp.eq.s32.totalorder %s19, 0
    %p88 = por %p86, %p87
    %s90 = sadd.s32 %s89, 1
    %p93 = scmp.eq.s32.totalorder %s13, 1
    %p94 = scmp.ne.s32.totalorder %s89, %s91
    %p95 = scmp.eq.s32.totalorder %s13, 0
    %p96 = por %p94, %p95
    %p97 = scmp.ne.s32.totalorder %s89, %s91
    %p98 = scmp.eq.s32.totalorder %s18, 1
    %p99 = por %p97, %p98
    %p100 = scmp.ne.s32.totalorder %s91, %s92
    %p101 = scmp.eq.s32.totalorder %s18, 0
    %p102 = por %p100, %p101
    %p103 = scmp.ne.s32.totalorder %s91, %s92
    %p104 = scmp.eq.s32.totalorder %s19, 1
    %p105 = por %p103, %p104
    %p107 = scmp.ne.s32.totalorder %s92, %s106
    %p108 = scmp.eq.s32.totalorder %s19, 0
    %p109 = por %p107, %p108
    %s111 = sadd.s32 %s110, 1
    %p114 = scmp.eq.s32.totalorder %s13, 1
    %p115 = scmp.ne.s32.totalorder %s110, %s112
    %p116 = scmp.eq.s32.totalorder %s13, 0
    %p117 = por %p115, %p116
    %p118 = scmp.ne.s32.totalorder %s110, %s112
    %p119 = scmp.eq.s32.totalorder %s18, 1
    %p120 = por %p118, %p119
    %p121 = scmp.ne.s32.totalorder %s112, %s113
    %p122 = scmp.eq.s32.totalorder %s18, 0
    %p123 = por %p121, %p122
    %p124 = scmp.ne.s32.totalorder %s112, %s113
    %p125 = scmp.eq.s32.totalorder %s19, 1
    %p126 = por %p124, %p125
    %p128 = scmp.ne.s32.totalorder %s113, %s127
    %p129 = scmp.eq.s32.totalorder %s19, 0
    %p130 = por %p128, %p129
    %s132 = sadd.s32 %s131, 1
    %p135 = scmp.eq.s32.totalorder %s13, 1
    %p136 = scmp.ne.s32.totalorder %s131, %s133
    %p137 = scmp.eq.s32.totalorder %s13, 0
    %p138 = por %p136, %p137
    %p139 = scmp.ne.s32.totalorder %s131, %s133
    %p140 = scmp.eq.s32.totalorder %s18, 1
    %p141 = por %p139, %p140
    %p142 = scmp.ne.s32.totalorder %s133, %s134
    %p143 = scmp.eq.s32.totalorder %s18, 0
    %p144 = por %p142, %p143
    %p145 = scmp.ne.s32.totalorder %s133, %s134
    %p146 = scmp.eq.s32.totalorder %s19, 1
    %p147 = por %p145, %p146
    %p149 = scmp.ne.s32.totalorder %s134, %s148
    %p150 = scmp.eq.s32.totalorder %s19, 0
    %p151 = por %p149, %p150
    %s153 = sadd.s32 %s152, 1
    %p156 = scmp.eq.s32.totalorder %s13, 1
    %p157 = scmp.ne.s32.totalorder %s152, %s154
    %p158 = scmp.eq.s32.totalorder %s13, 0
    %p159 = por %p157, %p158
    %p160 = scmp.ne.s32.totalorder %s152, %s154
    %p161 = scmp.eq.s32.totalorder %s18, 1
    %p162 = por %p160, %p161
    %p163 = scmp.ne.s32.totalorder %s154, %s155
    %p164 = scmp.eq.s32.totalorder %s18, 0
    %p165 = por %p163, %p164
    %p166 = scmp.ne.s32.totalorder %s154, %s155
    %p167 = scmp.eq.s32.totalorder %s19, 1
    %p168 = por %p166, %p167
    %p170 = scmp.ne.s32.totalorder %s155, %s169
    %p171 = scmp.eq.s32.totalorder %s19, 0
    %p172 = por %p170, %p171
    %s173 = ssub.s32 %s13, %s20
    %p174 = scmp.eq.s32.totalorder %s173, 0
    %s176 = sadd.s32 %s175, 1
    %s177 = scalar_select %p174, %s175, %s176
    %p180 = pneg %p174
    %p181 = scmp.eq.s32.totalorder %s13, 1
    %p182 = por %p180, %p181
    %p183 = scmp.ne.s32.totalorder %s175, %s178
    %p184 = scmp.eq.s32.totalorder %s13, 0
    %p185 = por %p183, %p184
    %p186 = scmp.ne.s32.totalorder %s175, %s178
    %p187 = scmp.eq.s32.totalorder %s18, 1
    %p188 = por %p186, %p187
    %p189 = scmp.ne.s32.totalorder %s178, %s179
    %p190 = scmp.eq.s32.totalorder %s18, 0
    %p191 = por %p189, %p190
    %p192 = scmp.ne.s32.totalorder %s178, %s179
    %p193 = scmp.eq.s32.totalorder %s19, 1
    %p194 = por %p192, %p193
    %p196 = scmp.ne.s32.totalorder %s179, %s195
    %p197 = scmp.eq.s32.totalorder %s19, 0
    %p198 = por %p196, %p197
    %p199 = scmp.le.s32.totalorder 1, %s13
    %p200 = scmp.lt.s32.totalorder %s13, 3
    %p201 = pnand %p199, %p200
    %p202 = pneg %p201
    // Predicated region
    $region9: #{splat_conv2d.1} parent=5 // pred_check
      _
    $region10: #{splat_conv2d.1} parent=5 // pred_check_branch
      %204 = sbr.rel (%p201) target = $region12
    $region11: #{splat_conv2d.1} parent=5 // pred_region
      %s205 = ssub.s32 %s13, 1
      // Predicated region
      $region13: #{splat_conv2d.1} parent=11 // pred_check
        %p206 = pneg %p60
      $region14: #{splat_conv2d.1} parent=11 // pred_check_branch
        %208 = sbr.rel (%p206) target = $region16
      $region15: #{splat_conv2d.1} parent=11 // pred_region
        _
      $region16: #{splat_conv2d.1} parent=11 // pred_fallthru
        _
      // Predicated region
      $region17: #{splat_conv2d.1} parent=11 // pred_check
        %p209 = pneg %p81
      $region18: #{splat_conv2d.1} parent=11 // pred_check_branch
        %211 = sbr.rel (%p209) target = $region20
      $region19: #{splat_conv2d.1} parent=11 // pred_region
        _
      $region20: #{splat_conv2d.1} parent=11 // pred_fallthru
        _
      // Predicated region
      $region21: #{splat_conv2d.1} parent=11 // pred_check
        %p212 = pneg %p102
      $region22: #{splat_conv2d.1} parent=11 // pred_check_branch
        %214 = sbr.rel (%p212) target = $region24
      $region23: #{splat_conv2d.1} parent=11 // pred_region
        _
      $region24: #{splat_conv2d.1} parent=11 // pred_fallthru
        _
      // Predicated region
      $region25: #{splat_conv2d.1} parent=11 // pred_check
        %p215 = pneg %p123
      $region26: #{splat_conv2d.1} parent=11 // pred_check_branch
        %217 = sbr.rel (%p215) target = $region28
      $region27: #{splat_conv2d.1} parent=11 // pred_region
        _
      $region28: #{splat_conv2d.1} parent=11 // pred_fallthru
        _
      // Predicated region
      $region29: #{splat_conv2d.1} parent=11 // pred_check
        %p218 = pneg %p144
      $region30: #{splat_conv2d.1} parent=11 // pred_check_branch
        %220 = sbr.rel (%p218) target = $region32
      $region31: #{splat_conv2d.1} parent=11 // pred_region
        _
      $region32: #{splat_conv2d.1} parent=11 // pred_fallthru
        _
      // Predicated region
      $region33: #{splat_conv2d.1} parent=11 // pred_check
        %p221 = pneg %p165
      $region34: #{splat_conv2d.1} parent=11 // pred_check_branch
        %223 = sbr.rel (%p221) target = $region36
      $region35: #{splat_conv2d.1} parent=11 // pred_region
        _
      $region36: #{splat_conv2d.1} parent=11 // pred_fallthru
        _
    $region12: #{splat_conv2d.1} parent=5 // pred_fallthru
      _
    %p224 = scmp.lt.s32.totalorder %s13, 2
    // Predicated region
    $region37: #{splat_conv2d.1} parent=5 // pred_check
      %p225 = pneg %p224
    $region38: #{splat_conv2d.1} parent=5 // pred_check_branch
      %227 = sbr.rel (%p225) target = $region40
    $region39: #{splat_conv2d.1} parent=5 // pred_region
      // Predicated region
      $region41: #{splat_conv2d.1} parent=39 // pred_check
        %p228 = pneg %p33
      $region42: #{splat_conv2d.1} parent=39 // pred_check_branch
        %230 = sbr.rel (%p228) target = $region44
      $region43: #{splat_conv2d.1} parent=39 // pred_region
        %p231 = scmp.lt.s32.totalorder %s13, 1
        %s232 = scalar_select %p231, %s13, 1
        %s233 = smul.addr %s232, 12
        %s234 = smul.addr %s233, 8
        %s235 = scalar_lea.vmem %s0, %s234
      $region44: #{splat_conv2d.1} parent=39 // pred_fallthru
        _
    $region40: #{splat_conv2d.1} parent=5 // pred_fallthru
      _
    %p236 = scmp.le.s32.totalorder 1, %s13
    %p237 = scmp.lt.s32.totalorder %s13, 3
    %p238 = pnand %p236, %p237
    %p239 = pneg %p238
    // Predicated region
    $region45: #{splat_conv2d.1} parent=5 // pred_check
      _
    $region46: #{splat_conv2d.1} parent=5 // pred_check_branch
      %241 = sbr.rel (%p238) target = $region48
    $region47: #{splat_conv2d.1} parent=5 // pred_region
      %s242 = ssub.s32 %s13, 1
      %p243 = scmp.lt.s32.totalorder %s18, 1
      %s244 = scalar_select %p243, %s18, 1
      %s245 = smul.addr %s244, 12
      %s246 = smul.addr %s245, 8
      %s247 = scalar_lea.vmem %s0, %s246
      %p248 = pneg %p39
      %p249 = pneg %p36
      %p250 = pneg %p60
      %p251 = pneg %p57
      %p252 = pneg %p81
      %p253 = pneg %p78
      %p254 = pneg %p102
      %p255 = pneg %p99
      %p256 = pneg %p123
      %p257 = pneg %p120
      %p258 = pneg %p144
      %p259 = pneg %p141
      %p260 = pneg %p165
      %p261 = pneg %p162
      %p262 = pneg %p191
      %p263 = pneg %p188
      %p264 = scmp.lt.s32.totalorder %s18, 1
      %s265 = scalar_select %p264, %s18, 1
      %s266 = smul.addr %s265, 2
      %s267 = smul.addr %s266, 4
      %s268 = scalar_lea.vmem %s7, %s267
      %p269 = scmp.lt.s32.totalorder %s18, 1
      %s270 = scalar_select %p269, %s18, 1
      %s271 = smul.addr %s270, 12
      %s272 = smul.addr %s271, 8
      %s273 = scalar_lea.vmem %s0, %s272
      %p274 = scmp.lt.s32.totalorder %s18, 1
      %s275 = scalar_select %p274, %s18, 1
      %s276 = smul.addr %s275, 2
      %s277 = smul.addr %s276, 4
      %s278 = scalar_lea.vmem %s7, %s277
      %v279 = vld [vmem:[%s1] sm:$0xf]
      %v280 = vld [vmem:[%s273] sm:$0xff]
      %v281 = vld [vmem:[%s273 + $0x8] sm:$0xff]
      %v282 = vld [vmem:[%s273 + $0x10] sm:$0xff]
      %v283 = vld [vmem:[%s273 + $0x18] sm:$0xff]
      %v284 = vld [vmem:[%s273 + $0x20] sm:$0x3]
      %v285 = vld [vmem:[%s273 + $0x28] sm:$0x3]
      %s286 = scalar_lea.vmem %s1, 4
      %v287 = vld [vmem:[%s286] sm:$0xf]
      %s288 = scalar_lea.vmem %s273, 48
      %v289 = vld [vmem:[%s288] sm:$0xff]
      %v290 = vld [vmem:[%s288 + $0x8] sm:$0xff]
      %v291 = vld [vmem:[%s288 + $0x10] sm:$0xff]
      %v292 = vld [vmem:[%s288 + $0x18] sm:$0xff]
      %v293 = vld [vmem:[%s288 + $0x20] sm:$0x3]
      %v294 = vld [vmem:[%s288 + $0x28] sm:$0x3]
      %v295 = vld [vmem:[%s2] sm:$0xf]
      %297 = vset.pattern.permute.xlu0 0
      %298 = vperm.xlu0 %297, %v295
      %v299 = vpop.permute.xlu0 %298
      %vm301 = vcmask 146432
      %v303 = vsel %vm301, %v279, 0
      %vm305 = vcmask 1041408
      %v307 = vsel %vm305, %v284, 0
      %v310 = vsel %vm305, %v285, 0
      %312 = vmatpush.msra.mxu0 0.0
      %313 = vmatpush.msra.mxu0 0.0
      %314 = vmatpush.msra.mxu0 0.0
      %315 = vmatpush.msra.mxu0 0.0
      %316 = vmatpush.msra.mxu0 0.0
      %317 = vmatpush.msra.mxu0 0.0
      %318 = vmatpush.msra.mxu0 0.0
      %319 = vmatpush.msra.mxu0 0.0
      %320 = vmatpush.msra.mxu0 0.0
      %321 = vmatpush.msra.mxu0 0.0
      %322 = vmatpush.msra.mxu0 0.0
      %323 = vmatpush.msra.mxu0 0.0
      %324 = vmatpush.msra.mxu0 0.0
      %325 = vmatpush.msra.mxu0 %v307
      %326 = vmatpush.msra.mxu0 %v282
      %327 = vmatpush.msra.mxu0 %v280
      %328 = vmatmul.f32.gmra.mxu0 %v303
      %v329 = vpop.f32.mrf.mxu0
      %v330 = vadd.f32 %v299, %v329
      %331 = vdwg.mxu0
      %332 = vmatpush.msra.mxu0 0.0
      %333 = vmatpush.msra.mxu0 0.0
      %334 = vmatpush.msra.mxu0 0.0
      %335 = vmatpush.msra.mxu0 0.0
      %336 = vmatpush.msra.mxu0 0.0
      %337 = vmatpush.msra.mxu0 0.0
      %338 = vmatpush.msra.mxu0 0.0
      %339 = vmatpush.msra.mxu0 0.0
      %340 = vmatpush.msra.mxu0 0.0
      %341 = vmatpush.msra.mxu0 0.0
      %342 = vmatpush.msra.mxu0 0.0
      %343 = vmatpush.msra.mxu0 0.0
      %344 = vmatpush.msra.mxu0 0.0
      %345 = vmatpush.msra.mxu0 %v310
      %346 = vmatpush.msra.mxu0 %v283
      %347 = vmatpush.msra.mxu0 %v281
      %348 = vmatmul.f32.gmra.mxu0 %v303
      %v349 = vpop.f32.mrf.mxu0
      %v350 = vadd.f32 %v299, %v349
      %351 = vdwg.mxu0
      %v352 = vmax.f32 %v330, 0.0
      %v353 = vmax.f32 %v350, 0.0
      %s354 = scalar_lea.vmem %s2, 4
      %v355 = vld [vmem:[%s354] sm:$0xf]
      %357 = vset.pattern.permute.xlu0 0
      %358 = vperm.xlu0 %357, %v355
      %v359 = vpop.permute.xlu0 %358
      %v362 = vsel %vm301, %v287, 0
      %v365 = vsel %vm305, %v293, 0
      %v368 = vsel %vm305, %v294, 0
      %370 = vmatpush.msra.mxu0 0.0
      %371 = vmatpush.msra.mxu0 0.0
      %372 = vmatpush.msra.mxu0 0.0
      %373 = vmatpush.msra.mxu0 0.0
      %374 = vmatpush.msra.mxu0 0.0
      %375 = vmatpush.msra.mxu0 0.0
      %376 = vmatpush.msra.mxu0 0.0
      %377 = vmatpush.msra.mxu0 0.0
      %378 = vmatpush.msra.mxu0 0.0
      %379 = vmatpush.msra.mxu0 0.0
      %380 = vmatpush.msra.mxu0 0.0
      %381 = vmatpush.msra.mxu0 0.0
      %382 = vmatpush.msra.mxu0 0.0
      %383 = vmatpush.msra.mxu0 %v365
      %384 = vmatpush.msra.mxu0 %v291
      %385 = vmatpush.msra.mxu0 %v289
      %386 = vmatmul.f32.gmra.mxu0 %v362
      %v387 = vpop.f32.mrf.mxu0
      %v388 = vadd.f32 %v359, %v387
      %389 = vdwg.mxu0
      %390 = vmatpush.msra.mxu0 0.0
      %391 = vmatpush.msra.mxu0 0.0
      %392 = vmatpush.msra.mxu0 0.0
      %393 = vmatpush.msra.mxu0 0.0
      %394 = vmatpush.msra.mxu0 0.0
      %395 = vmatpush.msra.mxu0 0.0
      %396 = vmatpush.msra.mxu0 0.0
      %397 = vmatpush.msra.mxu0 0.0
      %398 = vmatpush.msra.mxu0 0.0
      %399 = vmatpush.msra.mxu0 0.0
      %400 = vmatpush.msra.mxu0 0.0
      %401 = vmatpush.msra.mxu0 0.0
      %402 = vmatpush.msra.mxu0 0.0
      %403 = vmatpush.msra.mxu0 %v368
      %404 = vmatpush.msra.mxu0 %v292
      %405 = vmatpush.msra.mxu0 %v290
      %406 = vmatmul.f32.gmra.mxu0 %v362
      %v407 = vpop.f32.mrf.mxu0
      %v408 = vadd.f32 %v359, %v407
      %409 = vdwg.mxu0
      %v410 = vmax.f32 %v388, 0.0
      %v411 = vmax.f32 %v408, 0.0
      %v412 = vadd.f32 %v352, %v410
      %v413 = vadd.f32 %v353, %v411
      %vm414 = vcmask 1043456
      %v415 = vsel %vm414, %v412, 0.0
      %v416 = vsel %vm414, %v413, 0.0
      %v417 = vadd.f32 %v415, %v416
      %418 = vadd.xlane.f32.xlu0 %v417
      %v419 = vpop.xlane.xlu0 %418
      %v420 = vrcp.pop 256.0
      %v421 = vmul.f32 256.0, %v420
      %v422 = vsub.f32 1.0, %v421
      %v423 = vmul.f32 %v420, %v422
      %v424 = vadd.f32 %v420, %v423
      %vm425 = vweird.f32 %v420
      %v426 = vsel %vm425, %v420, %v424
      %v427 = vmul.f32 %v419, %v426
      %v428 = vld [vmem:[%s3] sm:$0xf]
      %v429 = vmul.f32 %v428, %v427
      %vm430 = vcmask 257024
      %v431 = vsel %vm430, %v429, 0.0
      %v432 = vrot.slane %v431, 4
      %v433 = vadd.f32 %v431, %v432
      %v434 = vrot.slane %v433, 2
      %v435 = vadd.f32 %v433, %v434
      %v436 = vrot.slane %v435, 1
      %v437 = vadd.f32 %v435, %v436
      %v438 = vld [vmem:[%s4] sm:$0x1]
      %v439 = vadd.f32 %v437, %v438
      %v440 = vmax.f32 %v439, 0.0
      %v441 = vld [vmem:[%s5] sm:$0xf]
      %v442 = vperm.slane %v440, 0
      %v443 = vmul.f32 %v441, %v442
      %v444 = vsel %vm430, %v443, 0.0
      %445 = vadd.xlane.f32.xlu0 %v444
      %v446 = vpop.xlane.xlu0 %445
      %v447 = vld [vmem:[%s6] sm:$0xf]
      %v448 = vadd.f32 %v446, %v447
      %s449 = scalar_lea.vmem %s5, 4
      %v450 = vld [vmem:[%s449] sm:$0xf]
      %v451 = vmul.f32 %v450, %v442
      %v452 = vsel %vm430, %v451, 0.0
      %453 = vadd.xlane.f32.xlu0 %v452
      %v454 = vpop.xlane.xlu0 %453
      %s455 = scalar_lea.vmem %s6, 4
      %v456 = vld [vmem:[%s455] sm:$0xf]
      %v457 = vadd.f32 %v454, %v456
      %v458 = vmax.f32 %v448, %v457
      %v459 = vsub.f32 %v448, %v458
      %v460 = vmul.f32 %v459, 1.442695
      %v461 = vpow.pop %v460
      %v462 = vsub.f32 %v457, %v458
      %v463 = vmul.f32 %v462, 1.442695
      %v464 = vpow.pop %v463
      %v465 = vadd.f32 %v461, %v464
      %v466 = vrcp.pop %v465
      %v467 = vmul.f32 %v465, %v466
      %v468 = vsub.f32 1.0, %v467
      %v469 = vmul.f32 %v466, %v468
      %v470 = vadd.f32 %v466, %v469
      %vm471 = vweird.f32 %v465
      %vm472 = vweird.f32 %v466
      %vm473 = vmor %vm471, %vm472
      %v474 = vsel %vm473, %v466, %v470
      %v475 = vand.u32 2147483647, %v465
      %vm476 = vcmp.eq.f32.partialorder %v475, 8.507059e+37
      %v477 = vand.u32 %v465, 2147483648
      %v478 = vor.u32 1.1754944e-38, %v477
      %v479 = vsel %vm476, %v478, %v474
      %v480 = vmul.f32 1.0, %v479
      %v481 = vmul.f32 %v461, %v480
      %v482 = vmul.f32 %v464, %v480
      %484 = vset.pattern.permute.xlu0 0
      %485 = vperm.xlu0 %484, %v481
      %v486 = vpop.permute.xlu0 %485
      %v488 = vmul.f32 %v352, %v486
      %v489 = vmul.f32 %v353, %v486
      %491 = vset.pattern.permute.xlu0 0
      %492 = vperm.xlu0 %491, %v482
      %v493 = vpop.permute.xlu0 %492
      %v495 = vmul.f32 %v410, %v493
      %v496 = vmul.f32 %v411, %v493
      %v497 = vadd.f32 %v488, %v495
      %v498 = vadd.f32 %v489, %v496
      %v501 = vrot.slane %v498, 4
      %v502 = vsel %vm414, %v497, %v501
      %504 = vst [vmem:[%s278] sm:$0xff] %v502
      %p505 = scmp.lt.s32.totalorder %s18, 1
      %s506 = scalar_select %p505, %s18, 1
      %s507 = smul.addr %s506, 2
      %s508 = smul.addr %s507, 4
      %s509 = scalar_lea.vmem %s7, %s508
      // Predicated region
      $region49: #{splat_conv2d.1} parent=47 // pred_check
        %p510 = pneg %p188
      $region50: #{splat_conv2d.1} parent=47 // pred_check_branch
        %512 = sbr.rel (%p510) target = $region52
      $region51: #{splat_conv2d.1} parent=47 // pred_region
        _
      $region52: #{splat_conv2d.1} parent=47 // pred_fallthru
        _
    $region48: #{splat_conv2d.1} parent=5 // pred_fallthru
      _
    %p513 = scmp.le.s32.totalorder 2, %s13
    // Predicated region
    $region53: #{splat_conv2d.1} parent=5 // pred_check
      %p514 = pneg %p513
    $region54: #{splat_conv2d.1} parent=5 // pred_check_branch
      %516 = sbr.rel (%p514) target = $region56
    $region55: #{splat_conv2d.1} parent=5 // pred_region
      %s517 = ssub.s32 %s13, 2
      // Predicated region
      $region57: #{splat_conv2d.1} parent=55 // pred_check
        %p518 = pneg %p194
      $region58: #{splat_conv2d.1} parent=55 // pred_check_branch
        %520 = sbr.rel (%p518) target = $region60
      $region59: #{splat_conv2d.1} parent=55 // pred_region
        %p521 = scmp.lt.s32.totalorder %s19, 1
        %s522 = scalar_select %p521, %s19, 1
        %s523 = smul.addr %s522, 2
        %s524 = smul.addr %s523, 4
        %s525 = scalar_lea.vmem %s7, %s524
      $region60: #{splat_conv2d.1} parent=55 // pred_fallthru
        _
    $region56: #{splat_conv2d.1} parent=5 // pred_fallthru
      _
  $region6: #{splat_conv2d.1} parent=0 // loop_footer
    %s17 = sadd.s32 1, %s13
  $region7: #{splat_conv2d.1} parent=0 // loop_footer_branch
    %12 = sbr.rel target = $region3
  $region8: #{splat_conv2d.1} parent=0 // loop_exit
    _

</llo_original>
